<compile_context>
chip_gen: v6e
topology: v6e:2x2x1
jax: 0.10.0
libtpu: 0.0.40
codegen_flags: <defaults>
</compile_context>

<pallas_src>
import jax
import jax.numpy as jnp
from jax.experimental import pallas as pl
from jax.experimental.pallas import tpu as pltpu


def _round_up(n, m):
    return ((n + m - 1) // m) * m


def _dense_cols(h, w, b):
    """One Linear layer in (features, batch) layout.

    h: (in_f, T) activations, batch on lanes.
    w: (out_f, in_f)  -- PyTorch nn.Linear weight layout.
    b: (out_f, 1)
    returns (out_f, T)
    """
    in_f = w.shape[1]
    acc = b + w[:, 0:1] * h[0:1, :]
    for k in range(1, in_f):
        acc = acc + w[:, k : k + 1] * h[k : k + 1, :]
    return acc


def _mlp_kernel(x_ref, w1_ref, b1_ref, w2_ref, b2_ref, w3_ref, b3_ref,
                w4_ref, b4_ref, w5_ref, b5_ref, o_ref):
    h = x_ref[...]                                                  # (in_f, T)
    h = jnp.maximum(_dense_cols(h, w1_ref[...], b1_ref[...]), 0.0)  # layer1 + ReLU
    h = jnp.maximum(_dense_cols(h, w2_ref[...], b2_ref[...]), 0.0)  # layer2 + ReLU
    h = jnp.maximum(_dense_cols(h, w3_ref[...], b3_ref[...]), 0.0)  # layer3 + ReLU
    h = jnp.maximum(_dense_cols(h, w4_ref[...], b4_ref[...]), 0.0)  # layer4 + ReLU
    o_ref[...] = _dense_cols(h, w5_ref[...], b5_ref[...])           # layer5 (no act)


def regression_mlp_forward(x, params, *, tile_cols=65536):
    """Forward pass of RegressionModel.

    x:      (N, input_dim) float32
    params: list of 5 (W, b) pairs with W in PyTorch layout (out_f, in_f), b (out_f,)
    returns (N, output_dim) float32
    """
    assert x.ndim == 2
    N, in_f = x.shape
    out_f = params[-1][0].shape[0]

    # Lane-dense layout: features on sublanes, batch on lanes.
    x_t = jnp.asarray(x, jnp.float32).T                    # (in_f, N)

    lane = 128
    tile = max(lane, min(int(tile_cols), _round_up(N, lane)))
    tile = _round_up(tile, lane)
    n_pad = _round_up(N, tile)
    if n_pad != N:
        x_t = jnp.pad(x_t, ((0, 0), (0, n_pad - N)))
    grid = (n_pad // tile,)

    w_args = [jnp.asarray(w, jnp.float32) for (w, _) in params]
    b_args = [jnp.asarray(b, jnp.float32).reshape(-1, 1) for (_, b) in params]

    in_specs = [pl.BlockSpec((in_f, tile), lambda i: (0, i))]
    call_args = [x_t]
    for w, b in zip(w_args, b_args):
        in_specs.append(pl.BlockSpec(w.shape, lambda i: (0, 0)))   # full tiny weight
        in_specs.append(pl.BlockSpec(b.shape, lambda i: (0, 0)))   # full tiny bias
        call_args.extend([w, b])

    y_t = pl.pallas_call(
        _mlp_kernel,
        out_shape=jax.ShapeDtypeStruct((out_f, n_pad), jnp.float32),
        grid_spec=pltpu.PrefetchScalarGridSpec(
            num_scalar_prefetch=0,
            grid=grid,
            in_specs=in_specs,
            out_specs=pl.BlockSpec((out_f, tile), lambda i: (0, i)),
        ),
        compiler_params=pltpu.CompilerParams(
            dimension_semantics=("parallel",),
            vmem_limit_bytes=32 * 1024 * 1024,
        ),
    )(*call_args)

    return y_t[:, :N].T                                    # (N, out_f)


if __name__ == "__main__":
    key = jax.random.PRNGKey(0)
    keys = jax.random.split(key, 11)

    in_dim, hid, out_dim = 1, 8, 1
    layer_dims = [(hid, in_dim), (hid, hid), (hid, hid), (hid, hid), (out_dim, hid)]

    # Deterministic params (scale mirrors torch.nn.Linear's uniform(-1/sqrt(in), 1/sqrt(in)))
    params = []
    for idx, (of, inf) in enumerate(layer_dims):
        bound = 1.0 / (inf ** 0.5)
        w = jax.random.uniform(keys[2 * idx], (of, inf), jnp.float32, -bound, bound)
        b = jax.random.uniform(keys[2 * idx + 1], (of,), jnp.float32, -bound, bound)
        params.append((w, b))

    # Small batch of scalar inputs, consistent with the module (input_dim=1)
    x = jax.random.normal(keys[10], (256, in_dim), dtype=jnp.float32)

    y = regression_mlp_forward(x, params)
    y = jax.block_until_ready(y)

    # Pure-JAX reference of the torch forward
    def ref(xv):
        h = xv
        for i, (w, b) in enumerate(params):
            h = h @ w.T + b
            if i < len(params) - 1:
                h = jnp.maximum(h, 0.0)
        return h

    y_ref = ref(x)
    assert y.shape == (256, out_dim) and y.dtype == jnp.float32
    assert jnp.allclose(y, y_ref, atol=1e-5, rtol=1e-5), float(jnp.max(jnp.abs(y - y_ref)))
    print("KERNEL_OK")
</pallas_src>

<mosaic_0001>
module attributes {stable_mosaic.version = 11 : i64} {
  func.func @_mlp_kernel(%arg0: i32, %arg1: memref<1x256xf32, #tpu.memory_space<vmem>>, %arg2: memref<8x1xf32, #tpu.memory_space<vmem>>, %arg3: memref<8x1xf32, #tpu.memory_space<vmem>>, %arg4: memref<8x8xf32, #tpu.memory_space<vmem>>, %arg5: memref<8x1xf32, #tpu.memory_space<vmem>>, %arg6: memref<8x8xf32, #tpu.memory_space<vmem>>, %arg7: memref<8x1xf32, #tpu.memory_space<vmem>>, %arg8: memref<8x8xf32, #tpu.memory_space<vmem>>, %arg9: memref<8x1xf32, #tpu.memory_space<vmem>>, %arg10: memref<1x8xf32, #tpu.memory_space<vmem>>, %arg11: memref<1x1xf32, #tpu.memory_space<vmem>>, %arg12: memref<1x256xf32, #tpu.memory_space<vmem>>) attributes {dimension_semantics = [#tpu.dimension_semantics<parallel>], iteration_bounds = array<i64: 1>, scalar_prefetch = 0 : i64, scratch_operands = 0 : i64, tpu.core_type = #tpu.core_type<tc>, window_params = [{transform_indices = @transform_0, window_bounds = array<i64: 1, 256>}, {pipeline_mode = #tpu.pipeline_mode<synchronous>, transform_indices = @transform_1, window_bounds = array<i64: 8, 1>}, {pipeline_mode = #tpu.pipeline_mode<synchronous>, transform_indices = @transform_2, window_bounds = array<i64: 8, 1>}, {pipeline_mode = #tpu.pipeline_mode<synchronous>, transform_indices = @transform_3, window_bounds = array<i64: 8, 8>}, {pipeline_mode = #tpu.pipeline_mode<synchronous>, transform_indices = @transform_4, window_bounds = array<i64: 8, 1>}, {pipeline_mode = #tpu.pipeline_mode<synchronous>, transform_indices = @transform_5, window_bounds = array<i64: 8, 8>}, {pipeline_mode = #tpu.pipeline_mode<synchronous>, transform_indices = @transform_6, window_bounds = array<i64: 8, 1>}, {pipeline_mode = #tpu.pipeline_mode<synchronous>, transform_indices = @transform_7, window_bounds = array<i64: 8, 8>}, {pipeline_mode = #tpu.pipeline_mode<synchronous>, transform_indices = @transform_8, window_bounds = array<i64: 8, 1>}, {pipeline_mode = #tpu.pipeline_mode<synchronous>, transform_indices = @transform_9, window_bounds = array<i64: 1, 8>}, {pipeline_mode = #tpu.pipeline_mode<synchronous>, transform_indices = @transform_10, window_bounds = array<i64: 1, 1>}, {transform_indices = @transform_11, window_bounds = array<i64: 1, 256>}]} {
    %c0 = arith.constant 0 : index
    %c0_0 = arith.constant 0 : index
    %0 = vector.load %arg1[%c0, %c0_0] : memref<1x256xf32, #tpu.memory_space<vmem>>, vector<1x256xf32>
    %c0_1 = arith.constant 0 : index
    %c0_2 = arith.constant 0 : index
    %1 = vector.load %arg2[%c0_1, %c0_2] : memref<8x1xf32, #tpu.memory_space<vmem>>, vector<8x1xf32>
    %c0_3 = arith.constant 0 : index
    %c0_4 = arith.constant 0 : index
    %2 = vector.load %arg3[%c0_3, %c0_4] : memref<8x1xf32, #tpu.memory_space<vmem>>, vector<8x1xf32>
    %3 = vector.broadcast %1 : vector<8x1xf32> to vector<8x256xf32>
    %4 = vector.broadcast %0 : vector<1x256xf32> to vector<8x256xf32>
    %5 = arith.mulf %3, %4 : vector<8x256xf32>
    %6 = vector.broadcast %2 : vector<8x1xf32> to vector<8x256xf32>
    %7 = arith.addf %6, %5 : vector<8x256xf32>
    %cst = arith.constant 0.000000e+00 : f32
    %8 = vector.broadcast %cst : f32 to vector<8x256xf32>
    %9 = arith.maximumf %7, %8 : vector<8x256xf32>
    %c0_5 = arith.constant 0 : index
    %c0_6 = arith.constant 0 : index
    %10 = vector.load %arg4[%c0_5, %c0_6] : memref<8x8xf32, #tpu.memory_space<vmem>>, vector<8x8xf32>
    %c0_7 = arith.constant 0 : index
    %c0_8 = arith.constant 0 : index
    %11 = vector.load %arg5[%c0_7, %c0_8] : memref<8x1xf32, #tpu.memory_space<vmem>>, vector<8x1xf32>
    %12 = vector.extract_strided_slice %10 {offsets = [0, 0], sizes = [8, 1], strides = [1, 1]} : vector<8x8xf32> to vector<8x1xf32>
    %13 = vector.extract_strided_slice %9 {offsets = [0, 0], sizes = [1, 256], strides = [1, 1]} : vector<8x256xf32> to vector<1x256xf32>
    %14 = vector.broadcast %12 : vector<8x1xf32> to vector<8x256xf32>
    %15 = vector.broadcast %13 : vector<1x256xf32> to vector<8x256xf32>
    %16 = arith.mulf %14, %15 : vector<8x256xf32>
    %17 = vector.broadcast %11 : vector<8x1xf32> to vector<8x256xf32>
    %18 = arith.addf %17, %16 : vector<8x256xf32>
    %19 = vector.extract_strided_slice %10 {offsets = [0, 1], sizes = [8, 1], strides = [1, 1]} : vector<8x8xf32> to vector<8x1xf32>
    %20 = vector.extract_strided_slice %9 {offsets = [1, 0], sizes = [1, 256], strides = [1, 1]} : vector<8x256xf32> to vector<1x256xf32>
    %21 = vector.broadcast %19 : vector<8x1xf32> to vector<8x256xf32>
    %22 = vector.broadcast %20 : vector<1x256xf32> to vector<8x256xf32>
    %23 = arith.mulf %21, %22 : vector<8x256xf32>
    %24 = arith.addf %18, %23 : vector<8x256xf32>
    %25 = vector.extract_strided_slice %10 {offsets = [0, 2], sizes = [8, 1], strides = [1, 1]} : vector<8x8xf32> to vector<8x1xf32>
    %26 = vector.extract_strided_slice %9 {offsets = [2, 0], sizes = [1, 256], strides = [1, 1]} : vector<8x256xf32> to vector<1x256xf32>
    %27 = vector.broadcast %25 : vector<8x1xf32> to vector<8x256xf32>
    %28 = vector.broadcast %26 : vector<1x256xf32> to vector<8x256xf32>
    %29 = arith.mulf %27, %28 : vector<8x256xf32>
    %30 = arith.addf %24, %29 : vector<8x256xf32>
    %31 = vector.extract_strided_slice %10 {offsets = [0, 3], sizes = [8, 1], strides = [1, 1]} : vector<8x8xf32> to vector<8x1xf32>
    %32 = vector.extract_strided_slice %9 {offsets = [3, 0], sizes = [1, 256], strides = [1, 1]} : vector<8x256xf32> to vector<1x256xf32>
    %33 = vector.broadcast %31 : vector<8x1xf32> to vector<8x256xf32>
    %34 = vector.broadcast %32 : vector<1x256xf32> to vector<8x256xf32>
    %35 = arith.mulf %33, %34 : vector<8x256xf32>
    %36 = arith.addf %30, %35 : vector<8x256xf32>
    %37 = vector.extract_strided_slice %10 {offsets = [0, 4], sizes = [8, 1], strides = [1, 1]} : vector<8x8xf32> to vector<8x1xf32>
    %38 = vector.extract_strided_slice %9 {offsets = [4, 0], sizes = [1, 256], strides = [1, 1]} : vector<8x256xf32> to vector<1x256xf32>
    %39 = vector.broadcast %37 : vector<8x1xf32> to vector<8x256xf32>
    %40 = vector.broadcast %38 : vector<1x256xf32> to vector<8x256xf32>
    %41 = arith.mulf %39, %40 : vector<8x256xf32>
    %42 = arith.addf %36, %41 : vector<8x256xf32>
    %43 = vector.extract_strided_slice %10 {offsets = [0, 5], sizes = [8, 1], strides = [1, 1]} : vector<8x8xf32> to vector<8x1xf32>
    %44 = vector.extract_strided_slice %9 {offsets = [5, 0], sizes = [1, 256], strides = [1, 1]} : vector<8x256xf32> to vector<1x256xf32>
    %45 = vector.broadcast %43 : vector<8x1xf32> to vector<8x256xf32>
    %46 = vector.broadcast %44 : vector<1x256xf32> to vector<8x256xf32>
    %47 = arith.mulf %45, %46 : vector<8x256xf32>
    %48 = arith.addf %42, %47 : vector<8x256xf32>
    %49 = vector.extract_strided_slice %10 {offsets = [0, 6], sizes = [8, 1], strides = [1, 1]} : vector<8x8xf32> to vector<8x1xf32>
    %50 = vector.extract_strided_slice %9 {offsets = [6, 0], sizes = [1, 256], strides = [1, 1]} : vector<8x256xf32> to vector<1x256xf32>
    %51 = vector.broadcast %49 : vector<8x1xf32> to vector<8x256xf32>
    %52 = vector.broadcast %50 : vector<1x256xf32> to vector<8x256xf32>
    %53 = arith.mulf %51, %52 : vector<8x256xf32>
    %54 = arith.addf %48, %53 : vector<8x256xf32>
    %55 = vector.extract_strided_slice %10 {offsets = [0, 7], sizes = [8, 1], strides = [1, 1]} : vector<8x8xf32> to vector<8x1xf32>
    %56 = vector.extract_strided_slice %9 {offsets = [7, 0], sizes = [1, 256], strides = [1, 1]} : vector<8x256xf32> to vector<1x256xf32>
    %57 = vector.broadcast %55 : vector<8x1xf32> to vector<8x256xf32>
    %58 = vector.broadcast %56 : vector<1x256xf32> to vector<8x256xf32>
    %59 = arith.mulf %57, %58 : vector<8x256xf32>
    %60 = arith.addf %54, %59 : vector<8x256xf32>
    %cst_9 = arith.constant 0.000000e+00 : f32
    %61 = vector.broadcast %cst_9 : f32 to vector<8x256xf32>
    %62 = arith.maximumf %60, %61 : vector<8x256xf32>
    %c0_10 = arith.constant 0 : index
    %c0_11 = arith.constant 0 : index
    %63 = vector.load %arg6[%c0_10, %c0_11] : memref<8x8xf32, #tpu.memory_space<vmem>>, vector<8x8xf32>
    %c0_12 = arith.constant 0 : index
    %c0_13 = arith.constant 0 : index
    %64 = vector.load %arg7[%c0_12, %c0_13] : memref<8x1xf32, #tpu.memory_space<vmem>>, vector<8x1xf32>
    %65 = vector.extract_strided_slice %63 {offsets = [0, 0], sizes = [8, 1], strides = [1, 1]} : vector<8x8xf32> to vector<8x1xf32>
    %66 = vector.extract_strided_slice %62 {offsets = [0, 0], sizes = [1, 256], strides = [1, 1]} : vector<8x256xf32> to vector<1x256xf32>
    %67 = vector.broadcast %65 : vector<8x1xf32> to vector<8x256xf32>
    %68 = vector.broadcast %66 : vector<1x256xf32> to vector<8x256xf32>
    %69 = arith.mulf %67, %68 : vector<8x256xf32>
    %70 = vector.broadcast %64 : vector<8x1xf32> to vector<8x256xf32>
    %71 = arith.addf %70, %69 : vector<8x256xf32>
    %72 = vector.extract_strided_slice %63 {offsets = [0, 1], sizes = [8, 1], strides = [1, 1]} : vector<8x8xf32> to vector<8x1xf32>
    %73 = vector.extract_strided_slice %62 {offsets = [1, 0], sizes = [1, 256], strides = [1, 1]} : vector<8x256xf32> to vector<1x256xf32>
    %74 = vector.broadcast %72 : vector<8x1xf32> to vector<8x256xf32>
    %75 = vector.broadcast %73 : vector<1x256xf32> to vector<8x256xf32>
    %76 = arith.mulf %74, %75 : vector<8x256xf32>
    %77 = arith.addf %71, %76 : vector<8x256xf32>
    %78 = vector.extract_strided_slice %63 {offsets = [0, 2], sizes = [8, 1], strides = [1, 1]} : vector<8x8xf32> to vector<8x1xf32>
    %79 = vector.extract_strided_slice %62 {offsets = [2, 0], sizes = [1, 256], strides = [1, 1]} : vector<8x256xf32> to vector<1x256xf32>
    %80 = vector.broadcast %78 : vector<8x1xf32> to vector<8x256xf32>
    %81 = vector.broadcast %79 : vector<1x256xf32> to vector<8x256xf32>
    %82 = arith.mulf %80, %81 : vector<8x256xf32>
    %83 = arith.addf %77, %82 : vector<8x256xf32>
    %84 = vector.extract_strided_slice %63 {offsets = [0, 3], sizes = [8, 1], strides = [1, 1]} : vector<8x8xf32> to vector<8x1xf32>
    %85 = vector.extract_strided_slice %62 {offsets = [3, 0], sizes = [1, 256], strides = [1, 1]} : vector<8x256xf32> to vector<1x256xf32>
    %86 = vector.broadcast %84 : vector<8x1xf32> to vector<8x256xf32>
    %87 = vector.broadcast %85 : vector<1x256xf32> to vector<8x256xf32>
    %88 = arith.mulf %86, %87 : vector<8x256xf32>
    %89 = arith.addf %83, %88 : vector<8x256xf32>
    %90 = vector.extract_strided_slice %63 {offsets = [0, 4], sizes = [8, 1], strides = [1, 1]} : vector<8x8xf32> to vector<8x1xf32>
    %91 = vector.extract_strided_slice %62 {offsets = [4, 0], sizes = [1, 256], strides = [1, 1]} : vector<8x256xf32> to vector<1x256xf32>
    %92 = vector.broadcast %90 : vector<8x1xf32> to vector<8x256xf32>
    %93 = vector.broadcast %91 : vector<1x256xf32> to vector<8x256xf32>
    %94 = arith.mulf %92, %93 : vector<8x256xf32>
    %95 = arith.addf %89, %94 : vector<8x256xf32>
    %96 = vector.extract_strided_slice %63 {offsets = [0, 5], sizes = [8, 1], strides = [1, 1]} : vector<8x8xf32> to vector<8x1xf32>
    %97 = vector.extract_strided_slice %62 {offsets = [5, 0], sizes = [1, 256], strides = [1, 1]} : vector<8x256xf32> to vector<1x256xf32>
    %98 = vector.broadcast %96 : vector<8x1xf32> to vector<8x256xf32>
    %99 = vector.broadcast %97 : vector<1x256xf32> to vector<8x256xf32>
    %100 = arith.mulf %98, %99 : vector<8x256xf32>
    %101 = arith.addf %95, %100 : vector<8x256xf32>
    %102 = vector.extract_strided_slice %63 {offsets = [0, 6], sizes = [8, 1], strides = [1, 1]} : vector<8x8xf32> to vector<8x1xf32>
    %103 = vector.extract_strided_slice %62 {offsets = [6, 0], sizes = [1, 256], strides = [1, 1]} : vector<8x256xf32> to vector<1x256xf32>
    %104 = vector.broadcast %102 : vector<8x1xf32> to vector<8x256xf32>
    %105 = vector.broadcast %103 : vector<1x256xf32> to vector<8x256xf32>
    %106 = arith.mulf %104, %105 : vector<8x256xf32>
    %107 = arith.addf %101, %106 : vector<8x256xf32>
    %108 = vector.extract_strided_slice %63 {offsets = [0, 7], sizes = [8, 1], strides = [1, 1]} : vector<8x8xf32> to vector<8x1xf32>
    %109 = vector.extract_strided_slice %62 {offsets = [7, 0], sizes = [1, 256], strides = [1, 1]} : vector<8x256xf32> to vector<1x256xf32>
    %110 = vector.broadcast %108 : vector<8x1xf32> to vector<8x256xf32>
    %111 = vector.broadcast %109 : vector<1x256xf32> to vector<8x256xf32>
    %112 = arith.mulf %110, %111 : vector<8x256xf32>
    %113 = arith.addf %107, %112 : vector<8x256xf32>
    %cst_14 = arith.constant 0.000000e+00 : f32
    %114 = vector.broadcast %cst_14 : f32 to vector<8x256xf32>
    %115 = arith.maximumf %113, %114 : vector<8x256xf32>
    %c0_15 = arith.constant 0 : index
    %c0_16 = arith.constant 0 : index
    %116 = vector.load %arg8[%c0_15, %c0_16] : memref<8x8xf32, #tpu.memory_space<vmem>>, vector<8x8xf32>
    %c0_17 = arith.constant 0 : index
    %c0_18 = arith.constant 0 : index
    %117 = vector.load %arg9[%c0_17, %c0_18] : memref<8x1xf32, #tpu.memory_space<vmem>>, vector<8x1xf32>
    %118 = vector.extract_strided_slice %116 {offsets = [0, 0], sizes = [8, 1], strides = [1, 1]} : vector<8x8xf32> to vector<8x1xf32>
    %119 = vector.extract_strided_slice %115 {offsets = [0, 0], sizes = [1, 256], strides = [1, 1]} : vector<8x256xf32> to vector<1x256xf32>
    %120 = vector.broadcast %118 : vector<8x1xf32> to vector<8x256xf32>
    %121 = vector.broadcast %119 : vector<1x256xf32> to vector<8x256xf32>
    %122 = arith.mulf %120, %121 : vector<8x256xf32>
    %123 = vector.broadcast %117 : vector<8x1xf32> to vector<8x256xf32>
    %124 = arith.addf %123, %122 : vector<8x256xf32>
    %125 = vector.extract_strided_slice %116 {offsets = [0, 1], sizes = [8, 1], strides = [1, 1]} : vector<8x8xf32> to vector<8x1xf32>
    %126 = vector.extract_strided_slice %115 {offsets = [1, 0], sizes = [1, 256], strides = [1, 1]} : vector<8x256xf32> to vector<1x256xf32>
    %127 = vector.broadcast %125 : vector<8x1xf32> to vector<8x256xf32>
    %128 = vector.broadcast %126 : vector<1x256xf32> to vector<8x256xf32>
    %129 = arith.mulf %127, %128 : vector<8x256xf32>
    %130 = arith.addf %124, %129 : vector<8x256xf32>
    %131 = vector.extract_strided_slice %116 {offsets = [0, 2], sizes = [8, 1], strides = [1, 1]} : vector<8x8xf32> to vector<8x1xf32>
    %132 = vector.extract_strided_slice %115 {offsets = [2, 0], sizes = [1, 256], strides = [1, 1]} : vector<8x256xf32> to vector<1x256xf32>
    %133 = vector.broadcast %131 : vector<8x1xf32> to vector<8x256xf32>
    %134 = vector.broadcast %132 : vector<1x256xf32> to vector<8x256xf32>
    %135 = arith.mulf %133, %134 : vector<8x256xf32>
    %136 = arith.addf %130, %135 : vector<8x256xf32>
    %137 = vector.extract_strided_slice %116 {offsets = [0, 3], sizes = [8, 1], strides = [1, 1]} : vector<8x8xf32> to vector<8x1xf32>
    %138 = vector.extract_strided_slice %115 {offsets = [3, 0], sizes = [1, 256], strides = [1, 1]} : vector<8x256xf32> to vector<1x256xf32>
    %139 = vector.broadcast %137 : vector<8x1xf32> to vector<8x256xf32>
    %140 = vector.broadcast %138 : vector<1x256xf32> to vector<8x256xf32>
    %141 = arith.mulf %139, %140 : vector<8x256xf32>
    %142 = arith.addf %136, %141 : vector<8x256xf32>
    %143 = vector.extract_strided_slice %116 {offsets = [0, 4], sizes = [8, 1], strides = [1, 1]} : vector<8x8xf32> to vector<8x1xf32>
    %144 = vector.extract_strided_slice %115 {offsets = [4, 0], sizes = [1, 256], strides = [1, 1]} : vector<8x256xf32> to vector<1x256xf32>
    %145 = vector.broadcast %143 : vector<8x1xf32> to vector<8x256xf32>
    %146 = vector.broadcast %144 : vector<1x256xf32> to vector<8x256xf32>
    %147 = arith.mulf %145, %146 : vector<8x256xf32>
    %148 = arith.addf %142, %147 : vector<8x256xf32>
    %149 = vector.extract_strided_slice %116 {offsets = [0, 5], sizes = [8, 1], strides = [1, 1]} : vector<8x8xf32> to vector<8x1xf32>
    %150 = vector.extract_strided_slice %115 {offsets = [5, 0], sizes = [1, 256], strides = [1, 1]} : vector<8x256xf32> to vector<1x256xf32>
    %151 = vector.broadcast %149 : vector<8x1xf32> to vector<8x256xf32>
    %152 = vector.broadcast %150 : vector<1x256xf32> to vector<8x256xf32>
    %153 = arith.mulf %151, %152 : vector<8x256xf32>
    %154 = arith.addf %148, %153 : vector<8x256xf32>
    %155 = vector.extract_strided_slice %116 {offsets = [0, 6], sizes = [8, 1], strides = [1, 1]} : vector<8x8xf32> to vector<8x1xf32>
    %156 = vector.extract_strided_slice %115 {offsets = [6, 0], sizes = [1, 256], strides = [1, 1]} : vector<8x256xf32> to vector<1x256xf32>
    %157 = vector.broadcast %155 : vector<8x1xf32> to vector<8x256xf32>
    %158 = vector.broadcast %156 : vector<1x256xf32> to vector<8x256xf32>
    %159 = arith.mulf %157, %158 : vector<8x256xf32>
    %160 = arith.addf %154, %159 : vector<8x256xf32>
    %161 = vector.extract_strided_slice %116 {offsets = [0, 7], sizes = [8, 1], strides = [1, 1]} : vector<8x8xf32> to vector<8x1xf32>
    %162 = vector.extract_strided_slice %115 {offsets = [7, 0], sizes = [1, 256], strides = [1, 1]} : vector<8x256xf32> to vector<1x256xf32>
    %163 = vector.broadcast %161 : vector<8x1xf32> to vector<8x256xf32>
    %164 = vector.broadcast %162 : vector<1x256xf32> to vector<8x256xf32>
    %165 = arith.mulf %163, %164 : vector<8x256xf32>
    %166 = arith.addf %160, %165 : vector<8x256xf32>
    %cst_19 = arith.constant 0.000000e+00 : f32
    %167 = vector.broadcast %cst_19 : f32 to vector<8x256xf32>
    %168 = arith.maximumf %166, %167 : vector<8x256xf32>
    %c0_20 = arith.constant 0 : index
    %c0_21 = arith.constant 0 : index
    %169 = vector.load %arg10[%c0_20, %c0_21] : memref<1x8xf32, #tpu.memory_space<vmem>>, vector<1x8xf32>
    %c0_22 = arith.constant 0 : index
    %c0_23 = arith.constant 0 : index
    %170 = vector.load %arg11[%c0_22, %c0_23] : memref<1x1xf32, #tpu.memory_space<vmem>>, vector<1x1xf32>
    %171 = vector.extract_strided_slice %169 {offsets = [0, 0], sizes = [1, 1], strides = [1, 1]} : vector<1x8xf32> to vector<1x1xf32>
    %172 = vector.extract_strided_slice %168 {offsets = [0, 0], sizes = [1, 256], strides = [1, 1]} : vector<8x256xf32> to vector<1x256xf32>
    %173 = vector.broadcast %171 : vector<1x1xf32> to vector<1x256xf32>
    %174 = arith.mulf %173, %172 : vector<1x256xf32>
    %175 = vector.broadcast %170 : vector<1x1xf32> to vector<1x256xf32>
    %176 = arith.addf %175, %174 : vector<1x256xf32>
    %177 = vector.extract_strided_slice %169 {offsets = [0, 1], sizes = [1, 1], strides = [1, 1]} : vector<1x8xf32> to vector<1x1xf32>
    %178 = vector.extract_strided_slice %168 {offsets = [1, 0], sizes = [1, 256], strides = [1, 1]} : vector<8x256xf32> to vector<1x256xf32>
    %179 = vector.broadcast %177 : vector<1x1xf32> to vector<1x256xf32>
    %180 = arith.mulf %179, %178 : vector<1x256xf32>
    %181 = arith.addf %176, %180 : vector<1x256xf32>
    %182 = vector.extract_strided_slice %169 {offsets = [0, 2], sizes = [1, 1], strides = [1, 1]} : vector<1x8xf32> to vector<1x1xf32>
    %183 = vector.extract_strided_slice %168 {offsets = [2, 0], sizes = [1, 256], strides = [1, 1]} : vector<8x256xf32> to vector<1x256xf32>
    %184 = vector.broadcast %182 : vector<1x1xf32> to vector<1x256xf32>
    %185 = arith.mulf %184, %183 : vector<1x256xf32>
    %186 = arith.addf %181, %185 : vector<1x256xf32>
    %187 = vector.extract_strided_slice %169 {offsets = [0, 3], sizes = [1, 1], strides = [1, 1]} : vector<1x8xf32> to vector<1x1xf32>
    %188 = vector.extract_strided_slice %168 {offsets = [3, 0], sizes = [1, 256], strides = [1, 1]} : vector<8x256xf32> to vector<1x256xf32>
    %189 = vector.broadcast %187 : vector<1x1xf32> to vector<1x256xf32>
    %190 = arith.mulf %189, %188 : vector<1x256xf32>
    %191 = arith.addf %186, %190 : vector<1x256xf32>
    %192 = vector.extract_strided_slice %169 {offsets = [0, 4], sizes = [1, 1], strides = [1, 1]} : vector<1x8xf32> to vector<1x1xf32>
    %193 = vector.extract_strided_slice %168 {offsets = [4, 0], sizes = [1, 256], strides = [1, 1]} : vector<8x256xf32> to vector<1x256xf32>
    %194 = vector.broadcast %192 : vector<1x1xf32> to vector<1x256xf32>
    %195 = arith.mulf %194, %193 : vector<1x256xf32>
    %196 = arith.addf %191, %195 : vector<1x256xf32>
    %197 = vector.extract_strided_slice %169 {offsets = [0, 5], sizes = [1, 1], strides = [1, 1]} : vector<1x8xf32> to vector<1x1xf32>
    %198 = vector.extract_strided_slice %168 {offsets = [5, 0], sizes = [1, 256], strides = [1, 1]} : vector<8x256xf32> to vector<1x256xf32>
    %199 = vector.broadcast %197 : vector<1x1xf32> to vector<1x256xf32>
    %200 = arith.mulf %199, %198 : vector<1x256xf32>
    %201 = arith.addf %196, %200 : vector<1x256xf32>
    %202 = vector.extract_strided_slice %169 {offsets = [0, 6], sizes = [1, 1], strides = [1, 1]} : vector<1x8xf32> to vector<1x1xf32>
    %203 = vector.extract_strided_slice %168 {offsets = [6, 0], sizes = [1, 256], strides = [1, 1]} : vector<8x256xf32> to vector<1x256xf32>
    %204 = vector.broadcast %202 : vector<1x1xf32> to vector<1x256xf32>
    %205 = arith.mulf %204, %203 : vector<1x256xf32>
    %206 = arith.addf %201, %205 : vector<1x256xf32>
    %207 = vector.extract_strided_slice %169 {offsets = [0, 7], sizes = [1, 1], strides = [1, 1]} : vector<1x8xf32> to vector<1x1xf32>
    %208 = vector.extract_strided_slice %168 {offsets = [7, 0], sizes = [1, 256], strides = [1, 1]} : vector<8x256xf32> to vector<1x256xf32>
    %209 = vector.broadcast %207 : vector<1x1xf32> to vector<1x256xf32>
    %210 = arith.mulf %209, %208 : vector<1x256xf32>
    %211 = arith.addf %206, %210 : vector<1x256xf32>
    %c0_24 = arith.constant 0 : index
    %c0_25 = arith.constant 0 : index
    %212 = vector.load %arg12[%c0_24, %c0_25] : memref<1x256xf32, #tpu.memory_space<vmem>>, vector<1x256xf32>
    tpu.vector_store %arg12[%c0_24, %c0_25], %211 {strides = array<i32>} : memref<1x256xf32, #tpu.memory_space<vmem>>, vector<1x256xf32>,
    return
  }
  func.func @transform_0(%arg0: i32) -> (i32, i32) {
    %c0_i32 = arith.constant 0 : i32
    %c0_i32_0 = arith.constant 0 : i32
    return %c0_i32, %arg0 : i32, i32
  }
  func.func @transform_1(%arg0: i32) -> (i32, i32) {
    %c0_i32 = arith.constant 0 : i32
    %c0_i32_0 = arith.constant 0 : i32
    %c0_i32_1 = arith.constant 0 : i32
    return %c0_i32, %c0_i32_0 : i32, i32
  }
  func.func @transform_2(%arg0: i32) -> (i32, i32) {
    %c0_i32 = arith.constant 0 : i32
    %c0_i32_0 = arith.constant 0 : i32
    %c0_i32_1 = arith.constant 0 : i32
    return %c0_i32, %c0_i32_0 : i32, i32
  }
  func.func @transform_3(%arg0: i32) -> (i32, i32) {
    %c0_i32 = arith.constant 0 : i32
    %c0_i32_0 = arith.constant 0 : i32
    %c0_i32_1 = arith.constant 0 : i32
    return %c0_i32, %c0_i32_0 : i32, i32
  }
  func.func @transform_4(%arg0: i32) -> (i32, i32) {
    %c0_i32 = arith.constant 0 : i32
    %c0_i32_0 = arith.constant 0 : i32
    %c0_i32_1 = arith.constant 0 : i32
    return %c0_i32, %c0_i32_0 : i32, i32
  }
  func.func @transform_5(%arg0: i32) -> (i32, i32) {
    %c0_i32 = arith.constant 0 : i32
    %c0_i32_0 = arith.constant 0 : i32
    %c0_i32_1 = arith.constant 0 : i32
    return %c0_i32, %c0_i32_0 : i32, i32
  }
  func.func @transform_6(%arg0: i32) -> (i32, i32) {
    %c0_i32 = arith.constant 0 : i32
    %c0_i32_0 = arith.constant 0 : i32
    %c0_i32_1 = arith.constant 0 : i32
    return %c0_i32, %c0_i32_0 : i32, i32
  }
  func.func @transform_7(%arg0: i32) -> (i32, i32) {
    %c0_i32 = arith.constant 0 : i32
    %c0_i32_0 = arith.constant 0 : i32
    %c0_i32_1 = arith.constant 0 : i32
    return %c0_i32, %c0_i32_0 : i32, i32
  }
  func.func @transform_8(%arg0: i32) -> (i32, i32) {
    %c0_i32 = arith.constant 0 : i32
    %c0_i32_0 = arith.constant 0 : i32
    %c0_i32_1 = arith.constant 0 : i32
    return %c0_i32, %c0_i32_0 : i32, i32
  }
  func.func @transform_9(%arg0: i32) -> (i32, i32) {
    %c0_i32 = arith.constant 0 : i32
    %c0_i32_0 = arith.constant 0 : i32
    %c0_i32_1 = arith.constant 0 : i32
    return %c0_i32, %c0_i32_0 : i32, i32
  }
  func.func @transform_10(%arg0: i32) -> (i32, i32) {
    %c0_i32 = arith.constant 0 : i32
    %c0_i32_0 = arith.constant 0 : i32
    %c0_i32_1 = arith.constant 0 : i32
    return %c0_i32, %c0_i32_0 : i32, i32
  }
  func.func @transform_11(%arg0: i32) -> (i32, i32) {
    %c0_i32 = arith.constant 0 : i32
    %c0_i32_0 = arith.constant 0 : i32
    return %c0_i32, %arg0 : i32, i32
  }
}

</mosaic_0001>

<llo_original>
// kernel: tpu_custom_call.1
$region0: #{tpu_custom_call.1}
  #allocation0 [shape = 'u32[]', space=smem, size = 0x4, offset = 0x4, fixed_abs, tag = 'smem constant byte address 0x4 - core index']
  #allocation1 [shape = 'u32[144,128]{1,0:T(1,128)}', space=vmem, size = 0x12000, scoped, tag = 'internal scratch']
  #allocation2 [shape = 'f32[1,1]{1,0:T(1,128)S(1)}', space=vmem, size = 0x200, scoped, tag = 'scoped memory for tpu_custom_call.1']
  %s0 = inlined_call_operand.vmem [shape: f32[1,256], index: 0, kind: input, shape index: {}]
  %s1 = inlined_call_operand.vmem [shape: f32[8,1], index: 1, kind: input, shape index: {}]
  %s2 = inlined_call_operand.vmem [shape: f32[8,1], index: 2, kind: input, shape index: {}]
  %s3 = inlined_call_operand.vmem [shape: f32[8,8], index: 3, kind: input, shape index: {}]
  %s4 = inlined_call_operand.vmem [shape: f32[8,1], index: 4, kind: input, shape index: {}]
  %s5 = inlined_call_operand.vmem [shape: f32[8,8], index: 5, kind: input, shape index: {}]
  %s6 = inlined_call_operand.vmem [shape: f32[8,1], index: 6, kind: input, shape index: {}]
  %s7 = inlined_call_operand.vmem [shape: f32[8,8], index: 7, kind: input, shape index: {}]
  %s8 = inlined_call_operand.vmem [shape: f32[8,1], index: 8, kind: input, shape index: {}]
  %s9 = inlined_call_operand.vmem [shape: f32[1,8], index: 9, kind: input, shape index: {}]
  %s10 = inlined_call_operand.<no memory space> [shape: f32[1,1], index: 10, kind: input, shape index: {}]
  %s11 = inlined_call_operand.hbm [shape: f32[1,256], index: 11, kind: output, shape index: {}]
  %s12 = sld [smem:[#allocation0]]
  $region54: #{tpu_custom_call.1} parent=0
    _
  %s14 = ssub.s32 1, %s12
  %s15 = scalar_select 0, %s14, %s12
  %v16 = vstv %s10
  %17 = vst [vmem:[#allocation2] sm:$0x1] %v16
  $region1: #{tpu_custom_call.1} parent=0
    #allocation3 [shape = 'u8[1024]{0}', space=vmem, size = 0x400, scoped, tag = 'output window, operand 0, single buffered']
    #allocation4 [shape = 's32[1]{0}', space=sflag, size = 0x4, scoped, tag = 'scoped memory for tpu_custom_call.1']
    %18 = vsyncpa [#allocation4], 0
    // Predicated region
    $region2: #{tpu_custom_call.1} parent=1 // pred_check
      _
    $region3: #{tpu_custom_call.1} parent=1 // pred_check_branch
      %20 = sbr.rel (0) target = $region5
    $region4: #{tpu_custom_call.1} parent=1 // pred_region
      _
    $region5: #{tpu_custom_call.1} parent=1 // pred_fallthru
      _
    // Predicated region
    $region6: #{tpu_custom_call.1} parent=1 // pred_check
      _
    $region7: #{tpu_custom_call.1} parent=1 // pred_check_branch
      %22 = sbr.rel (0) target = $region9
    $region8: #{tpu_custom_call.1} parent=1 // pred_region
      _
    $region9: #{tpu_custom_call.1} parent=1 // pred_fallthru
      _
    // Predicated region
    $region10: #{tpu_custom_call.1} parent=1 // pred_check
      _
    $region11: #{tpu_custom_call.1} parent=1 // pred_check_branch
      %24 = sbr.rel (0) target = $region13
    $region12: #{tpu_custom_call.1} parent=1 // pred_region
      _
    $region13: #{tpu_custom_call.1} parent=1 // pred_fallthru
      _
    // Predicated region
    $region14: #{tpu_custom_call.1} parent=1 // pred_check
      _
    $region15: #{tpu_custom_call.1} parent=1 // pred_check_branch
      %26 = sbr.rel (0) target = $region17
    $region16: #{tpu_custom_call.1} parent=1 // pred_region
      _
    $region17: #{tpu_custom_call.1} parent=1 // pred_fallthru
      _
    // Predicated region
    $region18: #{tpu_custom_call.1} parent=1 // pred_check
      _
    $region19: #{tpu_custom_call.1} parent=1 // pred_check_branch
      %28 = sbr.rel (0) target = $region21
    $region20: #{tpu_custom_call.1} parent=1 // pred_region
      _
    $region21: #{tpu_custom_call.1} parent=1 // pred_fallthru
      _
    // Predicated region
    $region22: #{tpu_custom_call.1} parent=1 // pred_check
      _
    $region23: #{tpu_custom_call.1} parent=1 // pred_check_branch
      %30 = sbr.rel (0) target = $region25
    $region24: #{tpu_custom_call.1} parent=1 // pred_region
      _
    $region25: #{tpu_custom_call.1} parent=1 // pred_fallthru
      _
    // Predicated region
    $region26: #{tpu_custom_call.1} parent=1 // pred_check
      _
    $region27: #{tpu_custom_call.1} parent=1 // pred_check_branch
      %32 = sbr.rel (0) target = $region29
    $region28: #{tpu_custom_call.1} parent=1 // pred_region
      _
    $region29: #{tpu_custom_call.1} parent=1 // pred_fallthru
      _
    // Predicated region
    $region30: #{tpu_custom_call.1} parent=1 // pred_check
      _
    $region31: #{tpu_custom_call.1} parent=1 // pred_check_branch
      %34 = sbr.rel (0) target = $region33
    $region32: #{tpu_custom_call.1} parent=1 // pred_region
      _
    $region33: #{tpu_custom_call.1} parent=1 // pred_fallthru
      _
    // Predicated region
    $region34: #{tpu_custom_call.1} parent=1 // pred_check
      _
    $region35: #{tpu_custom_call.1} parent=1 // pred_check_branch
      %36 = sbr.rel (0) target = $region37
    $region36: #{tpu_custom_call.1} parent=1 // pred_region
      _
    $region37: #{tpu_custom_call.1} parent=1 // pred_fallthru
      _
    // Predicated region
    $region38: #{tpu_custom_call.1} parent=1 // pred_check
      _
    $region39: #{tpu_custom_call.1} parent=1 // pred_check_branch
      %38 = sbr.rel (0) target = $region41
    $region40: #{tpu_custom_call.1} parent=1 // pred_region
      _
    $region41: #{tpu_custom_call.1} parent=1 // pred_fallthru
      _
    // Predicated region
    $region42: #{tpu_custom_call.1} parent=1 // pred_check
      _
    $region43: #{tpu_custom_call.1} parent=1 // pred_check_branch
      %40 = sbr.rel (0) target = $region45
    $region44: #{tpu_custom_call.1} parent=1 // pred_region
      _
    $region45: #{tpu_custom_call.1} parent=1 // pred_fallthru
      _
    %v41 = vld [vmem:[%s0] sm:$0x3]
    %v42 = vld [vmem:[%s1] sm:$0xff]
    %v43 = vld [vmem:[%s2] sm:$0xff]
    %45 = vset.pattern.permute.xlu0 0
    %46 = vperm.xlu0 %45, %v42
    %v47 = vpop.permute.xlu0 %46
    %v50 = vlaneseq
    %v51 = vshrl.u32 %v50, 7
    %v52 = vsub.s32 0, %v51
    %v53 = vrot.slane %v41, %v52
    %v54 = vlaneseq
    %v55 = vshrl.u32 %v54, 7
    %v56 = vsub.s32 1, %v55
    %v57 = vrot.slane %v41, %v56
    %v60 = vmul.f32 %v47, %v53
    %v61 = vmul.f32 %v47, %v57
    %63 = vset.pattern.permute.xlu0 0
    %64 = vperm.xlu0 %63, %v43
    %v65 = vpop.permute.xlu0 %64
    %v67 = vadd.f32 %v65, %v60
    %v68 = vadd.f32 %v65, %v61
    %v69 = vmax.f32 %v67, 0.0
    %v70 = vmax.f32 %v68, 0.0
    %v71 = vld [vmem:[%s3] sm:$0xff]
    %v72 = vld [vmem:[%s4] sm:$0xff]
    %74 = vset.pattern.permute.xlu0 0
    %75 = vperm.xlu0 %74, %v71
    %v76 = vpop.permute.xlu0 %75
    %v78 = vlaneseq
    %v79 = vshrl.u32 %v78, 7
    %v80 = vsub.s32 0, %v79
    %v81 = vrot.slane %v69, %v80
    %v82 = vlaneseq
    %v83 = vshrl.u32 %v82, 7
    %v84 = vsub.s32 0, %v83
    %v85 = vrot.slane %v70, %v84
    %v86 = vmul.f32 %v76, %v81
    %v87 = vmul.f32 %v76, %v85
    %89 = vset.pattern.permute.xlu0 0
    %90 = vperm.xlu0 %89, %v72
    %v91 = vpop.permute.xlu0 %90
    %v93 = vadd.f32 %v91, %v86
    %v94 = vadd.f32 %v91, %v87
    %95 = vset.pattern.permute.xlu0 1
    %96 = vperm.xlu0 %95, %v71
    %v97 = vpop.permute.xlu0 %96
    %v99 = vlaneseq
    %v100 = vshrl.u32 %v99, 7
    %v101 = vsub.s32 1, %v100
    %v102 = vrot.slane %v69, %v101
    %v103 = vlaneseq
    %v104 = vshrl.u32 %v103, 7
    %v105 = vsub.s32 1, %v104
    %v106 = vrot.slane %v70, %v105
    %v107 = vmul.f32 %v97, %v102
    %v108 = vmul.f32 %v97, %v106
    %v109 = vadd.f32 %v93, %v107
    %v110 = vadd.f32 %v94, %v108
    %111 = vset.pattern.permute.xlu0 2
    %112 = vperm.xlu0 %111, %v71
    %v113 = vpop.permute.xlu0 %112
    %v115 = vlaneseq
    %v116 = vshrl.u32 %v115, 7
    %v117 = vsub.s32 2, %v116
    %v118 = vrot.slane %v69, %v117
    %v119 = vlaneseq
    %v120 = vshrl.u32 %v119, 7
    %v121 = vsub.s32 2, %v120
    %v122 = vrot.slane %v70, %v121
    %v123 = vmul.f32 %v113, %v118
    %v124 = vmul.f32 %v113, %v122
    %v125 = vadd.f32 %v109, %v123
    %v126 = vadd.f32 %v110, %v124
    %127 = vset.pattern.permute.xlu0 3
    %128 = vperm.xlu0 %127, %v71
    %v129 = vpop.permute.xlu0 %128
    %v131 = vlaneseq
    %v132 = vshrl.u32 %v131, 7
    %v133 = vsub.s32 3, %v132
    %v134 = vrot.slane %v69, %v133
    %v135 = vlaneseq
    %v136 = vshrl.u32 %v135, 7
    %v137 = vsub.s32 3, %v136
    %v138 = vrot.slane %v70, %v137
    %v139 = vmul.f32 %v129, %v134
    %v140 = vmul.f32 %v129, %v138
    %v141 = vadd.f32 %v125, %v139
    %v142 = vadd.f32 %v126, %v140
    %143 = vset.pattern.permute.xlu0 4
    %144 = vperm.xlu0 %143, %v71
    %v145 = vpop.permute.xlu0 %144
    %v147 = vlaneseq
    %v148 = vshrl.u32 %v147, 7
    %v149 = vsub.s32 4, %v148
    %v150 = vrot.slane %v69, %v149
    %v151 = vlaneseq
    %v152 = vshrl.u32 %v151, 7
    %v153 = vsub.s32 4, %v152
    %v154 = vrot.slane %v70, %v153
    %v155 = vmul.f32 %v145, %v150
    %v156 = vmul.f32 %v145, %v154
    %v157 = vadd.f32 %v141, %v155
    %v158 = vadd.f32 %v142, %v156
    %159 = vset.pattern.permute.xlu0 5
    %160 = vperm.xlu0 %159, %v71
    %v161 = vpop.permute.xlu0 %160
    %v163 = vlaneseq
    %v164 = vshrl.u32 %v163, 7
    %v165 = vsub.s32 5, %v164
    %v166 = vrot.slane %v69, %v165
    %v167 = vlaneseq
    %v168 = vshrl.u32 %v167, 7
    %v169 = vsub.s32 5, %v168
    %v170 = vrot.slane %v70, %v169
    %v171 = vmul.f32 %v161, %v166
    %v172 = vmul.f32 %v161, %v170
    %v173 = vadd.f32 %v157, %v171
    %v174 = vadd.f32 %v158, %v172
    %175 = vset.pattern.permute.xlu0 6
    %176 = vperm.xlu0 %175, %v71
    %v177 = vpop.permute.xlu0 %176
    %v179 = vlaneseq
    %v180 = vshrl.u32 %v179, 7
    %v181 = vsub.s32 6, %v180
    %v182 = vrot.slane %v69, %v181
    %v183 = vlaneseq
    %v184 = vshrl.u32 %v183, 7
    %v185 = vsub.s32 6, %v184
    %v186 = vrot.slane %v70, %v185
    %v187 = vmul.f32 %v177, %v182
    %v188 = vmul.f32 %v177, %v186
    %v189 = vadd.f32 %v173, %v187
    %v190 = vadd.f32 %v174, %v188
    %191 = vset.pattern.permute.xlu0 7
    %192 = vperm.xlu0 %191, %v71
    %v193 = vpop.permute.xlu0 %192
    %v195 = vlaneseq
    %v196 = vshrl.u32 %v195, 7
    %v197 = vsub.s32 7, %v196
    %v198 = vrot.slane %v69, %v197
    %v199 = vlaneseq
    %v200 = vshrl.u32 %v199, 7
    %v201 = vsub.s32 7, %v200
    %v202 = vrot.slane %v70, %v201
    %v203 = vmul.f32 %v193, %v198
    %v204 = vmul.f32 %v193, %v202
    %v205 = vadd.f32 %v189, %v203
    %v206 = vadd.f32 %v190, %v204
    %v207 = vmax.f32 %v205, 0.0
    %v208 = vmax.f32 %v206, 0.0
    %v209 = vld [vmem:[%s5] sm:$0xff]
    %v210 = vld [vmem:[%s6] sm:$0xff]
    %212 = vset.pattern.permute.xlu0 0
    %213 = vperm.xlu0 %212, %v209
    %v214 = vpop.permute.xlu0 %213
    %v216 = vlaneseq
    %v217 = vshrl.u32 %v216, 7
    %v218 = vsub.s32 0, %v217
    %v219 = vrot.slane %v207, %v218
    %v220 = vlaneseq
    %v221 = vshrl.u32 %v220, 7
    %v222 = vsub.s32 0, %v221
    %v223 = vrot.slane %v208, %v222
    %v224 = vmul.f32 %v214, %v219
    %v225 = vmul.f32 %v214, %v223
    %227 = vset.pattern.permute.xlu0 0
    %228 = vperm.xlu0 %227, %v210
    %v229 = vpop.permute.xlu0 %228
    %v231 = vadd.f32 %v229, %v224
    %v232 = vadd.f32 %v229, %v225
    %233 = vset.pattern.permute.xlu0 1
    %234 = vperm.xlu0 %233, %v209
    %v235 = vpop.permute.xlu0 %234
    %v237 = vlaneseq
    %v238 = vshrl.u32 %v237, 7
    %v239 = vsub.s32 1, %v238
    %v240 = vrot.slane %v207, %v239
    %v241 = vlaneseq
    %v242 = vshrl.u32 %v241, 7
    %v243 = vsub.s32 1, %v242
    %v244 = vrot.slane %v208, %v243
    %v245 = vmul.f32 %v235, %v240
    %v246 = vmul.f32 %v235, %v244
    %v247 = vadd.f32 %v231, %v245
    %v248 = vadd.f32 %v232, %v246
    %249 = vset.pattern.permute.xlu0 2
    %250 = vperm.xlu0 %249, %v209
    %v251 = vpop.permute.xlu0 %250
    %v253 = vlaneseq
    %v254 = vshrl.u32 %v253, 7
    %v255 = vsub.s32 2, %v254
    %v256 = vrot.slane %v207, %v255
    %v257 = vlaneseq
    %v258 = vshrl.u32 %v257, 7
    %v259 = vsub.s32 2, %v258
    %v260 = vrot.slane %v208, %v259
    %v261 = vmul.f32 %v251, %v256
    %v262 = vmul.f32 %v251, %v260
    %v263 = vadd.f32 %v247, %v261
    %v264 = vadd.f32 %v248, %v262
    %265 = vset.pattern.permute.xlu0 3
    %266 = vperm.xlu0 %265, %v209
    %v267 = vpop.permute.xlu0 %266
    %v269 = vlaneseq
    %v270 = vshrl.u32 %v269, 7
    %v271 = vsub.s32 3, %v270
    %v272 = vrot.slane %v207, %v271
    %v273 = vlaneseq
    %v274 = vshrl.u32 %v273, 7
    %v275 = vsub.s32 3, %v274
    %v276 = vrot.slane %v208, %v275
    %v277 = vmul.f32 %v267, %v272
    %v278 = vmul.f32 %v267, %v276
    %v279 = vadd.f32 %v263, %v277
    %v280 = vadd.f32 %v264, %v278
    %281 = vset.pattern.permute.xlu0 4
    %282 = vperm.xlu0 %281, %v209
    %v283 = vpop.permute.xlu0 %282
    %v285 = vlaneseq
    %v286 = vshrl.u32 %v285, 7
    %v287 = vsub.s32 4, %v286
    %v288 = vrot.slane %v207, %v287
    %v289 = vlaneseq
    %v290 = vshrl.u32 %v289, 7
    %v291 = vsub.s32 4, %v290
    %v292 = vrot.slane %v208, %v291
    %v293 = vmul.f32 %v283, %v288
    %v294 = vmul.f32 %v283, %v292
    %v295 = vadd.f32 %v279, %v293
    %v296 = vadd.f32 %v280, %v294
    %297 = vset.pattern.permute.xlu0 5
    %298 = vperm.xlu0 %297, %v209
    %v299 = vpop.permute.xlu0 %298
    %v301 = vlaneseq
    %v302 = vshrl.u32 %v301, 7
    %v303 = vsub.s32 5, %v302
    %v304 = vrot.slane %v207, %v303
    %v305 = vlaneseq
    %v306 = vshrl.u32 %v305, 7
    %v307 = vsub.s32 5, %v306
    %v308 = vrot.slane %v208, %v307
    %v309 = vmul.f32 %v299, %v304
    %v310 = vmul.f32 %v299, %v308
    %v311 = vadd.f32 %v295, %v309
    %v312 = vadd.f32 %v296, %v310
    %313 = vset.pattern.permute.xlu0 6
    %314 = vperm.xlu0 %313, %v209
    %v315 = vpop.permute.xlu0 %314
    %v317 = vlaneseq
    %v318 = vshrl.u32 %v317, 7
    %v319 = vsub.s32 6, %v318
    %v320 = vrot.slane %v207, %v319
    %v321 = vlaneseq
    %v322 = vshrl.u32 %v321, 7
    %v323 = vsub.s32 6, %v322
    %v324 = vrot.slane %v208, %v323
    %v325 = vmul.f32 %v315, %v320
    %v326 = vmul.f32 %v315, %v324
    %v327 = vadd.f32 %v311, %v325
    %v328 = vadd.f32 %v312, %v326
    %329 = vset.pattern.permute.xlu0 7
    %330 = vperm.xlu0 %329, %v209
    %v331 = vpop.permute.xlu0 %330
    %v333 = vlaneseq
    %v334 = vshrl.u32 %v333, 7
    %v335 = vsub.s32 7, %v334
    %v336 = vrot.slane %v207, %v335
    %v337 = vlaneseq
    %v338 = vshrl.u32 %v337, 7
    %v339 = vsub.s32 7, %v338
    %v340 = vrot.slane %v208, %v339
    %v341 = vmul.f32 %v331, %v336
    %v342 = vmul.f32 %v331, %v340
    %v343 = vadd.f32 %v327, %v341
    %v344 = vadd.f32 %v328, %v342
    %v345 = vmax.f32 %v343, 0.0
    %v346 = vmax.f32 %v344, 0.0
    %v347 = vld [vmem:[%s7] sm:$0xff]
    %v348 = vld [vmem:[%s8] sm:$0xff]
    %350 = vset.pattern.permute.xlu0 0
    %351 = vperm.xlu0 %350, %v347
    %v352 = vpop.permute.xlu0 %351
    %v354 = vlaneseq
    %v355 = vshrl.u32 %v354, 7
    %v356 = vsub.s32 0, %v355
    %v357 = vrot.slane %v345, %v356
    %v358 = vlaneseq
    %v359 = vshrl.u32 %v358, 7
    %v360 = vsub.s32 0, %v359
    %v361 = vrot.slane %v346, %v360
    %v362 = vmul.f32 %v352, %v357
    %v363 = vmul.f32 %v352, %v361
    %365 = vset.pattern.permute.xlu0 0
    %366 = vperm.xlu0 %365, %v348
    %v367 = vpop.permute.xlu0 %366
    %v369 = vadd.f32 %v367, %v362
    %v370 = vadd.f32 %v367, %v363
    %371 = vset.pattern.permute.xlu0 1
    %372 = vperm.xlu0 %371, %v347
    %v373 = vpop.permute.xlu0 %372
    %v375 = vlaneseq
    %v376 = vshrl.u32 %v375, 7
    %v377 = vsub.s32 1, %v376
    %v378 = vrot.slane %v345, %v377
    %v379 = vlaneseq
    %v380 = vshrl.u32 %v379, 7
    %v381 = vsub.s32 1, %v380
    %v382 = vrot.slane %v346, %v381
    %v383 = vmul.f32 %v373, %v378
    %v384 = vmul.f32 %v373, %v382
    %v385 = vadd.f32 %v369, %v383
    %v386 = vadd.f32 %v370, %v384
    %387 = vset.pattern.permute.xlu0 2
    %388 = vperm.xlu0 %387, %v347
    %v389 = vpop.permute.xlu0 %388
    %v391 = vlaneseq
    %v392 = vshrl.u32 %v391, 7
    %v393 = vsub.s32 2, %v392
    %v394 = vrot.slane %v345, %v393
    %v395 = vlaneseq
    %v396 = vshrl.u32 %v395, 7
    %v397 = vsub.s32 2, %v396
    %v398 = vrot.slane %v346, %v397
    %v399 = vmul.f32 %v389, %v394
    %v400 = vmul.f32 %v389, %v398
    %v401 = vadd.f32 %v385, %v399
    %v402 = vadd.f32 %v386, %v400
    %403 = vset.pattern.permute.xlu0 3
    %404 = vperm.xlu0 %403, %v347
    %v405 = vpop.permute.xlu0 %404
    %v407 = vlaneseq
    %v408 = vshrl.u32 %v407, 7
    %v409 = vsub.s32 3, %v408
    %v410 = vrot.slane %v345, %v409
    %v411 = vlaneseq
    %v412 = vshrl.u32 %v411, 7
    %v413 = vsub.s32 3, %v412
    %v414 = vrot.slane %v346, %v413
    %v415 = vmul.f32 %v405, %v410
    %v416 = vmul.f32 %v405, %v414
    %v417 = vadd.f32 %v401, %v415
    %v418 = vadd.f32 %v402, %v416
    %419 = vset.pattern.permute.xlu0 4
    %420 = vperm.xlu0 %419, %v347
    %v421 = vpop.permute.xlu0 %420
    %v423 = vlaneseq
    %v424 = vshrl.u32 %v423, 7
    %v425 = vsub.s32 4, %v424
    %v426 = vrot.slane %v345, %v425
    %v427 = vlaneseq
    %v428 = vshrl.u32 %v427, 7
    %v429 = vsub.s32 4, %v428
    %v430 = vrot.slane %v346, %v429
    %v431 = vmul.f32 %v421, %v426
    %v432 = vmul.f32 %v421, %v430
    %v433 = vadd.f32 %v417, %v431
    %v434 = vadd.f32 %v418, %v432
    %435 = vset.pattern.permute.xlu0 5
    %436 = vperm.xlu0 %435, %v347
    %v437 = vpop.permute.xlu0 %436
    %v439 = vlaneseq
    %v440 = vshrl.u32 %v439, 7
    %v441 = vsub.s32 5, %v440
    %v442 = vrot.slane %v345, %v441
    %v443 = vlaneseq
    %v444 = vshrl.u32 %v443, 7
    %v445 = vsub.s32 5, %v444
    %v446 = vrot.slane %v346, %v445
    %v447 = vmul.f32 %v437, %v442
    %v448 = vmul.f32 %v437, %v446
    %v449 = vadd.f32 %v433, %v447
    %v450 = vadd.f32 %v434, %v448
    %451 = vset.pattern.permute.xlu0 6
    %452 = vperm.xlu0 %451, %v347
    %v453 = vpop.permute.xlu0 %452
    %v455 = vlaneseq
    %v456 = vshrl.u32 %v455, 7
    %v457 = vsub.s32 6, %v456
    %v458 = vrot.slane %v345, %v457
    %v459 = vlaneseq
    %v460 = vshrl.u32 %v459, 7
    %v461 = vsub.s32 6, %v460
    %v462 = vrot.slane %v346, %v461
    %v463 = vmul.f32 %v453, %v458
    %v464 = vmul.f32 %v453, %v462
    %v465 = vadd.f32 %v449, %v463
    %v466 = vadd.f32 %v450, %v464
    %467 = vset.pattern.permute.xlu0 7
    %468 = vperm.xlu0 %467, %v347
    %v469 = vpop.permute.xlu0 %468
    %v471 = vlaneseq
    %v472 = vshrl.u32 %v471, 7
    %v473 = vsub.s32 7, %v472
    %v474 = vrot.slane %v345, %v473
    %v475 = vlaneseq
    %v476 = vshrl.u32 %v475, 7
    %v477 = vsub.s32 7, %v476
    %v478 = vrot.slane %v346, %v477
    %v479 = vmul.f32 %v469, %v474
    %v480 = vmul.f32 %v469, %v478
    %v481 = vadd.f32 %v465, %v479
    %v482 = vadd.f32 %v466, %v480
    %v483 = vmax.f32 %v481, 0.0
    %v484 = vmax.f32 %v482, 0.0
    %v485 = vld [vmem:[%s9] sm:$0x1]
    %v486 = vld [vmem:[#allocation2] sm:$0x1]
    %488 = vset.pattern.permute.xlu0 0
    %489 = vperm.xlu0 %488, %v485
    %v490 = vpop.permute.xlu0 %489
    %v492 = vlaneseq
    %v493 = vshrl.u32 %v492, 7
    %v494 = vsub.s32 0, %v493
    %v495 = vrot.slane %v490, %v494
    %v496 = vmul.f32 %v495, %v483
    %v497 = vmul.f32 %v495, %v484
    %499 = vset.pattern.permute.xlu0 0
    %500 = vperm.xlu0 %499, %v486
    %v501 = vpop.permute.xlu0 %500
    %v503 = vlaneseq
    %v504 = vshrl.u32 %v503, 7
    %v505 = vsub.s32 0, %v504
    %v506 = vrot.slane %v501, %v505
    %v507 = vadd.f32 %v506, %v496
    %v508 = vadd.f32 %v506, %v497
    %509 = vset.pattern.permute.xlu0 1
    %510 = vperm.xlu0 %509, %v485
    %v511 = vpop.permute.xlu0 %510
    %v513 = vlaneseq
    %v514 = vshrl.u32 %v513, 7
    %v515 = vsub.s32 0, %v514
    %v516 = vrot.slane %v511, %v515
    %v517 = vmul.f32 %v516, %v483
    %v518 = vmul.f32 %v516, %v484
    %v521 = vrot.slane %v517, 1
    %v522 = vrot.slane %v518, 1
    %v525 = vadd.f32 %v507, %v521
    %v526 = vadd.f32 %v508, %v522
    %527 = vset.pattern.permute.xlu0 2
    %528 = vperm.xlu0 %527, %v485
    %v529 = vpop.permute.xlu0 %528
    %v531 = vlaneseq
    %v532 = vshrl.u32 %v531, 7
    %v533 = vsub.s32 0, %v532
    %v534 = vrot.slane %v529, %v533
    %v535 = vmul.f32 %v534, %v483
    %v536 = vmul.f32 %v534, %v484
    %v539 = vrot.slane %v535, 2
    %v540 = vrot.slane %v536, 2
    %v543 = vadd.f32 %v525, %v539
    %v544 = vadd.f32 %v526, %v540
    %545 = vset.pattern.permute.xlu0 3
    %546 = vperm.xlu0 %545, %v485
    %v547 = vpop.permute.xlu0 %546
    %v549 = vlaneseq
    %v550 = vshrl.u32 %v549, 7
    %v551 = vsub.s32 0, %v550
    %v552 = vrot.slane %v547, %v551
    %v553 = vmul.f32 %v552, %v483
    %v554 = vmul.f32 %v552, %v484
    %v557 = vrot.slane %v553, 3
    %v558 = vrot.slane %v554, 3
    %v561 = vadd.f32 %v543, %v557
    %v562 = vadd.f32 %v544, %v558
    %563 = vset.pattern.permute.xlu0 4
    %564 = vperm.xlu0 %563, %v485
    %v565 = vpop.permute.xlu0 %564
    %v567 = vlaneseq
    %v568 = vshrl.u32 %v567, 7
    %v569 = vsub.s32 0, %v568
    %v570 = vrot.slane %v565, %v569
    %v571 = vmul.f32 %v570, %v483
    %v572 = vmul.f32 %v570, %v484
    %v575 = vrot.slane %v571, 4
    %v576 = vrot.slane %v572, 4
    %v579 = vadd.f32 %v561, %v575
    %v580 = vadd.f32 %v562, %v576
    %581 = vset.pattern.permute.xlu0 5
    %582 = vperm.xlu0 %581, %v485
    %v583 = vpop.permute.xlu0 %582
    %v585 = vlaneseq
    %v586 = vshrl.u32 %v585, 7
    %v587 = vsub.s32 0, %v586
    %v588 = vrot.slane %v583, %v587
    %v589 = vmul.f32 %v588, %v483
    %v590 = vmul.f32 %v588, %v484
    %v593 = vrot.slane %v589, 5
    %v594 = vrot.slane %v590, 5
    %v597 = vadd.f32 %v579, %v593
    %v598 = vadd.f32 %v580, %v594
    %599 = vset.pattern.permute.xlu0 6
    %600 = vperm.xlu0 %599, %v485
    %v601 = vpop.permute.xlu0 %600
    %v603 = vlaneseq
    %v604 = vshrl.u32 %v603, 7
    %v605 = vsub.s32 0, %v604
    %v606 = vrot.slane %v601, %v605
    %v607 = vmul.f32 %v606, %v483
    %v608 = vmul.f32 %v606, %v484
    %v611 = vrot.slane %v607, 6
    %v612 = vrot.slane %v608, 6
    %v615 = vadd.f32 %v597, %v611
    %v616 = vadd.f32 %v598, %v612
    %617 = vset.pattern.permute.xlu0 7
    %618 = vperm.xlu0 %617, %v485
    %v619 = vpop.permute.xlu0 %618
    %v621 = vlaneseq
    %v622 = vshrl.u32 %v621, 7
    %v623 = vsub.s32 0, %v622
    %v624 = vrot.slane %v619, %v623
    %v625 = vmul.f32 %v624, %v483
    %v626 = vmul.f32 %v624, %v484
    %v629 = vrot.slane %v625, 7
    %v630 = vrot.slane %v626, 7
    %v633 = vadd.f32 %v615, %v629
    %v634 = vadd.f32 %v616, %v630
    %v637 = vcombine.low %v633, %v634
    %v639 = vunpack.c.l.s4 1966171168
    %v640 = vunpack.c.0.s8 %v639
    %v641 = vlaneseq
    %v642 = vshrl.u32 %v641, 7
    %v643 = vsub.s32 %v640, %v642
    %v644 = vrot.slane %v637, %v643
    %v646 = vunpack.c.l.s4 1966171168
    %v647 = vunpack.c.0.s8 %v646
    %v648 = vlaneseq
    %v649 = vshrl.u32 %v648, 7
    %v650 = vsub.s32 %v647, %v649
    %v651 = vrot.slane %v644, %v650
    %v653 = vlaneseq
    %vm654 = vcmp.ge.s32.totalorder %v653, 0
    %vm655 = vcmp.lt.s32.totalorder %v653, 256
    %vm656 = vmand %vm654, %vm655
    %657 = vst.msk [vmem:[#allocation3] sm:$0x3] %vm656, %v651
    // Predicated region
    $region46: #{tpu_custom_call.1} parent=1 // pred_check
      _
    $region47: #{tpu_custom_call.1} parent=1 // pred_check_branch
      %659 = sbr.rel (0) target = $region49
    $region48: #{tpu_custom_call.1} parent=1 // pred_region
      %s661 = ssub.s32 32, 32
      %662 = vsyncadd [#allocation4], %s661
      %s664 = sshll.u32 [#allocation3], 4
      %s665 = int_to_ptr.vmem [resolvable:$true] %s664
      %667 = dma.vmem_to_hbm [thread:$0]  %s665, 32, %s11, [#allocation4]
    $region49: #{tpu_custom_call.1} parent=1 // pred_fallthru
      _
    // Predicated region
    $region50: #{tpu_custom_call.1} parent=1 // pred_check
      _
    $region51: #{tpu_custom_call.1} parent=1 // pred_check_branch
      %669 = sbr.rel (0) target = $region53
    $region52: #{tpu_custom_call.1} parent=1 // pred_region
      %670 = dma.done [#allocation4], 32
    $region53: #{tpu_custom_call.1} parent=1 // pred_fallthru
      _
    %671 = vsyncpa [#allocation4], 1

</llo_original>
